<compile_context>
chip_gen: v7x
topology: tpu7x:2x2x1
jax: 0.10.0
libtpu: 0.0.40
codegen_flags: <defaults>
</compile_context>

<pallas_src>
import functools

import jax
import jax.numpy as jnp
from jax.experimental import pallas as pl
from jax.experimental.pallas import tpu as pltpu

LANE = 128
SUBLANE = 8


def _round_up(x, m):
    return (x + m - 1) // m * m


# ----------------------------------------------------------------------------
# Kernel
# ----------------------------------------------------------------------------
def qnetwork_kernel(x_ref, w1_ref, w2_ref, w3_ref, o_ref):
    """Fused fc1 -> relu -> fc2 -> relu -> fc3.

    Biases are pre-folded into the weight slabs (x carries a ones column and
    column `hidden` of h1/h2 is a constant-1 channel), so the body is just
    three MXU dots and two VPU maxes, all resident in VMEM.  Operands are
    bf16; accumulation / ReLU run in f32, then re-cast to bf16 so the next dot
    stays on the MXU's native bf16 path.  Output is stored in f32.
    """
    h1 = jnp.maximum(
        jnp.dot(x_ref[...], w1_ref[...], preferred_element_type=jnp.float32), 0.0)
    h2 = jnp.maximum(
        jnp.dot(h1.astype(w2_ref.dtype), w2_ref[...],
                preferred_element_type=jnp.float32), 0.0)
    o_ref[...] = jnp.dot(h2.astype(w3_ref.dtype), w3_ref[...],
                         preferred_element_type=jnp.float32)


# ----------------------------------------------------------------------------
# Parameter packing: fold biases + pad to slabs (run ONCE per param update)
# ----------------------------------------------------------------------------
def pack_qnetwork_params(params, hidden_pad=LANE, out_pad=SUBLANE,
                         dtype=jnp.bfloat16):
    """Build 3 padded [in, out] slabs with biases folded in.

    Layout tricks:
      * input x is augmented with a ones column at index `state_size`
        -> row `state_size` of W1 holds b1.
      * column `hidden` of W1 is set so h1[:, hidden] == 1 (a constant-1
        channel, exact in bf16) -> row `hidden` of W2 holds b2;
        W2[hidden, hidden] = 1 keeps the channel alive in h2 -> row `hidden`
        of W3 holds b3.
      * all other padded rows/cols are zero, so padding never contaminates
        the real columns.  out_pad is only 8 lanes (action_size 2 -> 8) so the
        output slab / writeback stays small.
    """
    w1, b1, w2, b2, w3, b3 = params
    state_size, hidden = w1.shape
    action_size = w3.shape[1]
    assert hidden + 1 <= hidden_pad and action_size <= out_pad
    k1 = _round_up(state_size + 1, SUBLANE)

    # fc1 slab: [k1, hidden_pad]
    w1p = jnp.zeros((k1, hidden_pad), jnp.float32)
    w1p = w1p.at[:state_size, :hidden].set(w1)
    w1p = w1p.at[state_size, :hidden].set(b1.reshape(-1))
    w1p = w1p.at[state_size, hidden].set(1.0)        # constant-1 hidden channel

    # fc2 slab: [hidden_pad, hidden_pad]
    w2p = jnp.zeros((hidden_pad, hidden_pad), jnp.float32)
    w2p = w2p.at[:hidden, :hidden].set(w2)
    w2p = w2p.at[hidden, :hidden].set(b2.reshape(-1))
    w2p = w2p.at[hidden, hidden].set(1.0)            # carry the ones channel

    # fc3 slab: [hidden_pad, out_pad]
    w3p = jnp.zeros((hidden_pad, out_pad), jnp.float32)
    w3p = w3p.at[:hidden, :action_size].set(w3)
    w3p = w3p.at[hidden, :action_size].set(b3.reshape(-1))

    return (w1p.astype(dtype), w2p.astype(dtype), w3p.astype(dtype)), action_size


# ----------------------------------------------------------------------------
# Jitted forward (packed slabs are passed in; packing is NOT re-done per call)
# ----------------------------------------------------------------------------
@functools.partial(jax.jit, static_argnames=("action_size", "block_batch"))
def qnetwork_forward(x, w1p, w2p, w3p, *, action_size, block_batch=1024):
    """x: [batch, state_size] float32 -> [batch, action_size] float32."""
    batch, state_size = x.shape
    k1, hidden_pad = w1p.shape
    out_pad = w3p.shape[1]

    # Batch tile: big (up to 1024-row) tiles amortize the ~0.35us/step
    # pipeline overhead, but cap so any non-tiny batch gets >= 2 grid steps so
    # dimension_semantics=("parallel",) can keep both v7x TensorCores busy.
    # VMEM footprint even at 1024 rows (double-buffered) is well under the
    # scoped limit on all generations, incl. v7x's 64 MiB.
    if batch <= 2 * SUBLANE:
        tile_b = _round_up(max(batch, SUBLANE), SUBLANE)
    else:
        tile_b = min(block_batch, _round_up((batch + 1) // 2, SUBLANE))
    b_pad = _round_up(batch, tile_b)

    # Augmented, padded input: [x | 1 | 0 ...] in bf16; fuses under jit.
    x_aug = jnp.zeros((b_pad, k1), w1p.dtype)
    x_aug = x_aug.at[:batch, :state_size].set(x.astype(w1p.dtype))
    x_aug = x_aug.at[:batch, state_size].set(1.0)

    grid = (b_pad // tile_b,)

    # NOTE: double-buffering of the constant-index weight slabs could be
    # disabled with pipeline_mode=pl.Buffered(1); it only saves ~130 KiB of
    # VMEM (nothing here is near any limit), so the default is kept for
    # portability across JAX versions.
    out_padded = pl.pallas_call(
        qnetwork_kernel,
        out_shape=jax.ShapeDtypeStruct((b_pad, out_pad), jnp.float32),
        grid_spec=pltpu.PrefetchScalarGridSpec(
            num_scalar_prefetch=0,
            grid=grid,
            in_specs=[
                pl.BlockSpec((tile_b, k1), lambda i: (i, 0)),
                # Constant block index -> weights stay VMEM-resident across
                # grid steps (loaded once, no per-tile re-DMA).
                pl.BlockSpec((k1, hidden_pad), lambda i: (0, 0)),
                pl.BlockSpec((hidden_pad, hidden_pad), lambda i: (0, 0)),
                pl.BlockSpec((hidden_pad, out_pad), lambda i: (0, 0)),
            ],
            out_specs=pl.BlockSpec((tile_b, out_pad), lambda i: (i, 0)),
        ),
        compiler_params=pltpu.CompilerParams(
            dimension_semantics=("parallel",),  # shards batch tiles across TCs on v7x
        ),
    )(x_aug, w1p, w2p, w3p)

    # Slice off batch padding and the (small, 8-lane) output padding.
    return out_padded[:batch, :action_size]


# ----------------------------------------------------------------------------
# Init + pure-JAX reference
# ----------------------------------------------------------------------------
def init_qnetwork_params(key, state_size, action_size, hidden=24):
    """PyTorch-style uniform fan-in init; weights stored as [in, out]."""
    def linear_init(k, fan_in, fan_out):
        kw, kb = jax.random.split(k)
        bound = 1.0 / jnp.sqrt(jnp.float32(fan_in))
        w = jax.random.uniform(kw, (fan_in, fan_out), jnp.float32, -bound, bound)
        b = jax.random.uniform(kb, (1, fan_out), jnp.float32, -bound, bound)
        return w, b

    k1, k2, k3 = jax.random.split(key, 3)
    w1, b1 = linear_init(k1, state_size, hidden)
    w2, b2 = linear_init(k2, hidden, hidden)
    w3, b3 = linear_init(k3, hidden, action_size)
    return (w1, b1, w2, b2, w3, b3)


def qnetwork_reference(x, params):
    w1, b1, w2, b2, w3, b3 = params
    h1 = jnp.maximum(x @ w1 + b1, 0.0)
    h2 = jnp.maximum(h1 @ w2 + b2, 0.0)
    return h2 @ w3 + b3


if __name__ == "__main__":
    # CartPole sizes: state_size=4, action_size=2.
    state_size, action_size = 4, 2

    key = jax.random.PRNGKey(0)
    kx, kp, kx2 = jax.random.split(key, 3)
    params = init_qnetwork_params(kp, state_size, action_size)

    # Pack / fold biases ONCE (per parameter update), not per forward call.
    (w1p, w2p, w3p), act = pack_qnetwork_params(params)
    assert act == action_size

    # bf16 operands -> loosened tolerance vs the f32 reference.
    ATOL = RTOL = 5e-2

    # Small inference-style batch (single grid step).
    x_small = jax.random.normal(kx, (8, state_size), dtype=jnp.float32)
    out_small = jax.block_until_ready(
        qnetwork_forward(x_small, w1p, w2p, w3p, action_size=action_size))
    ref_small = qnetwork_reference(x_small, params)
    assert out_small.shape == (8, action_size)
    assert jnp.allclose(out_small, ref_small, atol=ATOL, rtol=RTOL)

    # Larger (non-multiple) batch: exercises the multi-step batch grid,
    # padding, and the >=2-step tile cap.
    x_big = jax.random.normal(kx2, (300, state_size), dtype=jnp.float32)
    out_big = jax.block_until_ready(
        qnetwork_forward(x_big, w1p, w2p, w3p, action_size=action_size))
    ref_big = qnetwork_reference(x_big, params)
    assert out_big.shape == (300, action_size)
    assert jnp.allclose(out_big, ref_big, atol=ATOL, rtol=RTOL)

    print("KERNEL_OK")
</pallas_src>

<mosaic_0001>
module attributes {stable_mosaic.version = 11 : i64} {
  func.func @qnetwork_kernel(%arg0: i32, %arg1: memref<8x8xbf16, #tpu.memory_space<vmem>>, %arg2: memref<8x128xbf16, #tpu.memory_space<vmem>>, %arg3: memref<128x128xbf16, #tpu.memory_space<vmem>>, %arg4: memref<128x8xbf16, #tpu.memory_space<vmem>>, %arg5: memref<8x8xf32, #tpu.memory_space<vmem>>) attributes {dimension_semantics = [#tpu.dimension_semantics<parallel>], iteration_bounds = array<i64: 1>, scalar_prefetch = 0 : i64, scratch_operands = 0 : i64, tpu.core_type = #tpu.core_type<tc>, window_params = [{transform_indices = @transform_0, window_bounds = array<i64: 8, 8>}, {pipeline_mode = #tpu.pipeline_mode<synchronous>, transform_indices = @transform_1, window_bounds = array<i64: 8, 128>}, {pipeline_mode = #tpu.pipeline_mode<synchronous>, transform_indices = @transform_2, window_bounds = array<i64: 128, 128>}, {pipeline_mode = #tpu.pipeline_mode<synchronous>, transform_indices = @transform_3, window_bounds = array<i64: 128, 8>}, {transform_indices = @transform_4, window_bounds = array<i64: 8, 8>}]} {
    %c0 = arith.constant 0 : index
    %c0_0 = arith.constant 0 : index
    %0 = vector.load %arg1[%c0, %c0_0] : memref<8x8xbf16, #tpu.memory_space<vmem>>, vector<8x8xbf16>
    %c0_1 = arith.constant 0 : index
    %c0_2 = arith.constant 0 : index
    %1 = vector.load %arg2[%c0_1, %c0_2] : memref<8x128xbf16, #tpu.memory_space<vmem>>, vector<8x128xbf16>
    %cst = arith.constant dense<0.000000e+00> : vector<8x128xf32>
    %2 = tpu.matmul %0, %1, %cst {dimension_numbers = #tpu.dot_dimension_numbers<[1], [0], [0], [1], [0, 0, 1, 1], [], []>} : vector<8x8xbf16>, vector<8x128xbf16>, vector<8x128xf32> -> vector<8x128xf32>
    %cst_3 = arith.constant 0.000000e+00 : f32
    %3 = vector.broadcast %cst_3 : f32 to vector<8x128xf32>
    %4 = arith.maximumf %2, %3 : vector<8x128xf32>
    %5 = arith.truncf %4 : vector<8x128xf32> to vector<8x128xbf16>
    %c0_4 = arith.constant 0 : index
    %c0_5 = arith.constant 0 : index
    %6 = vector.load %arg3[%c0_4, %c0_5] : memref<128x128xbf16, #tpu.memory_space<vmem>>, vector<128x128xbf16>
    %cst_6 = arith.constant dense<0.000000e+00> : vector<8x128xf32>
    %7 = tpu.matmul %5, %6, %cst_6 {dimension_numbers = #tpu.dot_dimension_numbers<[1], [0], [0], [1], [0, 0, 1, 1], [], []>} : vector<8x128xbf16>, vector<128x128xbf16>, vector<8x128xf32> -> vector<8x128xf32>
    %cst_7 = arith.constant 0.000000e+00 : f32
    %8 = vector.broadcast %cst_7 : f32 to vector<8x128xf32>
    %9 = arith.maximumf %7, %8 : vector<8x128xf32>
    %10 = arith.truncf %9 : vector<8x128xf32> to vector<8x128xbf16>
    %c0_8 = arith.constant 0 : index
    %c0_9 = arith.constant 0 : index
    %11 = vector.load %arg4[%c0_8, %c0_9] : memref<128x8xbf16, #tpu.memory_space<vmem>>, vector<128x8xbf16>
    %cst_10 = arith.constant dense<0.000000e+00> : vector<8x8xf32>
    %12 = tpu.matmul %10, %11, %cst_10 {dimension_numbers = #tpu.dot_dimension_numbers<[1], [0], [0], [1], [0, 0, 1, 1], [], []>} : vector<8x128xbf16>, vector<128x8xbf16>, vector<8x8xf32> -> vector<8x8xf32>
    %c0_11 = arith.constant 0 : index
    %c0_12 = arith.constant 0 : index
    %13 = vector.load %arg5[%c0_11, %c0_12] : memref<8x8xf32, #tpu.memory_space<vmem>>, vector<8x8xf32>
    tpu.vector_store %arg5[%c0_11, %c0_12], %12 {strides = array<i32>} : memref<8x8xf32, #tpu.memory_space<vmem>>, vector<8x8xf32>,
    return
  }
  func.func @transform_0(%arg0: i32) -> (i32, i32) {
    %c0_i32 = arith.constant 0 : i32
    %c0_i32_0 = arith.constant 0 : i32
    return %arg0, %c0_i32 : i32, i32
  }
  func.func @transform_1(%arg0: i32) -> (i32, i32) {
    %c0_i32 = arith.constant 0 : i32
    %c0_i32_0 = arith.constant 0 : i32
    %c0_i32_1 = arith.constant 0 : i32
    return %c0_i32, %c0_i32_0 : i32, i32
  }
  func.func @transform_2(%arg0: i32) -> (i32, i32) {
    %c0_i32 = arith.constant 0 : i32
    %c0_i32_0 = arith.constant 0 : i32
    %c0_i32_1 = arith.constant 0 : i32
    return %c0_i32, %c0_i32_0 : i32, i32
  }
  func.func @transform_3(%arg0: i32) -> (i32, i32) {
    %c0_i32 = arith.constant 0 : i32
    %c0_i32_0 = arith.constant 0 : i32
    %c0_i32_1 = arith.constant 0 : i32
    return %c0_i32, %c0_i32_0 : i32, i32
  }
  func.func @transform_4(%arg0: i32) -> (i32, i32) {
    %c0_i32 = arith.constant 0 : i32
    %c0_i32_0 = arith.constant 0 : i32
    return %arg0, %c0_i32 : i32, i32
  }
}

</mosaic_0001>

<llo_original>
// kernel: qnetwork_forward.1
$region0: #{qnetwork_forward.1}
  #allocation0 [shape = 'u32[]', space=smem, size = 0x4, offset = 0x4, fixed_abs, tag = 'smem constant byte address 0x4 - core index']
  #allocation1 [shape = 'u32[144,128]{1,0:T(1,128)}', space=vmem, size = 0x12000, scoped, tag = 'internal scratch']
  %s0 = inlined_call_operand.vmem [shape: bf16[8,8], index: 0, kind: input, shape index: {}]
  %s1 = inlined_call_operand.vmem [shape: bf16[8,128], index: 1, kind: input, shape index: {}]
  %s2 = inlined_call_operand.vmem [shape: bf16[128,128], index: 2, kind: input, shape index: {}]
  %s3 = inlined_call_operand.vmem [shape: bf16[128,8], index: 3, kind: input, shape index: {}]
  %s4 = inlined_call_operand.vmem [shape: f32[8,8], index: 4, kind: output, shape index: {}]
  %s5 = sld [smem:[#allocation0]]
  $region26: #{qnetwork_forward.1} parent=0
    _
  %s7 = ssub.s32 1, %s5
  %s8 = scalar_select 0, %s7, %s5
  // Predicated region
  $region2: #{qnetwork_forward.1} parent=0 // pred_check
    _
  $region3: #{qnetwork_forward.1} parent=0 // pred_check_branch
    %10 = sbr.rel (0) target = $region5
  $region4: #{qnetwork_forward.1} parent=0 // pred_region
    _
  $region5: #{qnetwork_forward.1} parent=0 // pred_fallthru
    _
  // Predicated region
  $region6: #{qnetwork_forward.1} parent=0 // pred_check
    _
  $region7: #{qnetwork_forward.1} parent=0 // pred_check_branch
    %12 = sbr.rel (0) target = $region9
  $region8: #{qnetwork_forward.1} parent=0 // pred_region
    _
  $region9: #{qnetwork_forward.1} parent=0 // pred_fallthru
    _
  // Predicated region
  $region10: #{qnetwork_forward.1} parent=0 // pred_check
    _
  $region11: #{qnetwork_forward.1} parent=0 // pred_check_branch
    %14 = sbr.rel (0) target = $region13
  $region12: #{qnetwork_forward.1} parent=0 // pred_region
    _
  $region13: #{qnetwork_forward.1} parent=0 // pred_fallthru
    _
  // Predicated region
  $region14: #{qnetwork_forward.1} parent=0 // pred_check
    _
  $region15: #{qnetwork_forward.1} parent=0 // pred_check_branch
    %16 = sbr.rel (0) target = $region17
  $region16: #{qnetwork_forward.1} parent=0 // pred_region
    _
  $region17: #{qnetwork_forward.1} parent=0 // pred_fallthru
    _
  %v18 = vld [vmem:[%s0] sm:$0xf]
  %v19 = vld [vmem:[%s1] sm:$0xf]
  %vm20 = vcmask 64512
  %v22 = vsel %vm20, %v18, 0
  %vm24 = vcmask 1043456
  %v26 = vsel %vm24, %v19, 0
  %28 = vmatprep.subr.bf16.mxu0 0
  %29 = vmatpush1.bf16.msra.mxu0 %v26
  %30 = vmatprep.subr.bf16.mxu0 0
  %31 = vmatpush1.bf16.msra.mxu0 0
  %32 = vmatprep.subr.bf16.mxu0 0
  %33 = vmatpush1.bf16.msra.mxu0 0
  %34 = vmatprep.subr.bf16.mxu0 0
  %35 = vmatpush1.bf16.msra.mxu0 0
  %36 = vmatprep.subr.bf16.mxu0 0
  %37 = vmatpush1.bf16.msra.mxu0 0
  %38 = vmatprep.subr.bf16.mxu0 0
  %39 = vmatpush1.bf16.msra.mxu0 0
  %40 = vmatprep.subr.bf16.mxu0 0
  %41 = vmatpush1.bf16.msra.mxu0 0
  %42 = vmatprep.subr.bf16.mxu0 0
  %43 = vmatpush1.bf16.msra.mxu0 0
  %44 = vmatprep.subr.bf16.mxu0 0
  %45 = vmatpush1.bf16.msra.mxu0 0
  %46 = vmatprep.subr.bf16.mxu0 0
  %47 = vmatpush1.bf16.msra.mxu0 0
  %48 = vmatprep.subr.bf16.mxu0 0
  %49 = vmatpush1.bf16.msra.mxu0 0
  %50 = vmatprep.subr.bf16.mxu0 0
  %51 = vmatpush1.bf16.msra.mxu0 0
  %52 = vmatprep.subr.bf16.mxu0 0
  %53 = vmatpush1.bf16.msra.mxu0 0
  %54 = vmatprep.subr.bf16.mxu0 0
  %55 = vmatpush1.bf16.msra.mxu0 0
  %56 = vmatprep.subr.bf16.mxu0 0
  %57 = vmatpush1.bf16.msra.mxu0 0
  %58 = vmatprep.subr.bf16.mxu0 0
  %59 = vmatpush1.bf16.msra.mxu0 0
  %60 = vmatprep.mubr.bf16.mxu0 0
  %61 = vmatmul.mubr.bf16.gmra.mrb[0].mxu0 %v22
  %v62 = vpop.f32.mrb[0].mxu0
  %v63 = vadd.f32 0.0, %v62
  %v64 = vpop.f32.mrb[0].mxu0
  %v65 = vpop.f32.mrb[0].mxu0
  %v66 = vpop.f32.mrb[0].mxu0
  %67 = vdwg.mxu0
  %v68 = vmax.f32 %v63, 0.0
  %v69 = vpack.c.bf16 %v68, %v68
  %v70 = vld [vmem:[%s2] sm:$0xf]
  %v71 = vld [vmem:[%s2 + $0x4] sm:$0xf]
  %v72 = vld [vmem:[%s2 + $0x8] sm:$0xf]
  %v73 = vld [vmem:[%s2 + $0xc] sm:$0xf]
  %v74 = vld [vmem:[%s2 + $0x10] sm:$0xf]
  %v75 = vld [vmem:[%s2 + $0x14] sm:$0xf]
  %v76 = vld [vmem:[%s2 + $0x18] sm:$0xf]
  %v77 = vld [vmem:[%s2 + $0x1c] sm:$0xf]
  %v78 = vld [vmem:[%s2 + $0x20] sm:$0xf]
  %v79 = vld [vmem:[%s2 + $0x24] sm:$0xf]
  %v80 = vld [vmem:[%s2 + $0x28] sm:$0xf]
  %v81 = vld [vmem:[%s2 + $0x2c] sm:$0xf]
  %v82 = vld [vmem:[%s2 + $0x30] sm:$0xf]
  %v83 = vld [vmem:[%s2 + $0x34] sm:$0xf]
  %v84 = vld [vmem:[%s2 + $0x38] sm:$0xf]
  %v85 = vld [vmem:[%s2 + $0x3c] sm:$0xf]
  %v102 = vunpack.c.l.b16 %v70
  %v103 = vunpack.c.l.b16 %v71
  %v104 = vunpack.c.l.b16 %v72
  %v105 = vunpack.c.l.b16 %v73
  %v106 = vunpack.c.l.b16 %v74
  %v107 = vunpack.c.l.b16 %v75
  %v108 = vunpack.c.l.b16 %v76
  %v109 = vunpack.c.l.b16 %v77
  %v110 = vunpack.c.l.b16 %v78
  %v111 = vunpack.c.l.b16 %v79
  %v112 = vunpack.c.l.b16 %v80
  %v113 = vunpack.c.l.b16 %v81
  %v114 = vunpack.c.l.b16 %v82
  %v115 = vunpack.c.l.b16 %v83
  %v116 = vunpack.c.l.b16 %v84
  %v117 = vunpack.c.l.b16 %v85
  %v118 = vpack.c.b16 %v103, %v102
  %v119 = vpack.c.b16 %v105, %v104
  %v120 = vpack.c.b16 %v107, %v106
  %v121 = vpack.c.b16 %v109, %v108
  %v122 = vpack.c.b16 %v111, %v110
  %v123 = vpack.c.b16 %v113, %v112
  %v124 = vpack.c.b16 %v115, %v114
  %v125 = vpack.c.b16 %v117, %v116
  %134 = vmatprep.subr.bf16.mxu0 0
  %135 = vmatpush1.bf16.msra.mxu0 %v118
  %136 = vmatprep.subr.bf16.mxu0 0
  %137 = vmatpush1.bf16.msra.mxu0 %v119
  %138 = vmatprep.subr.bf16.mxu0 0
  %139 = vmatpush1.bf16.msra.mxu0 %v120
  %140 = vmatprep.subr.bf16.mxu0 0
  %141 = vmatpush1.bf16.msra.mxu0 %v121
  %142 = vmatprep.subr.bf16.mxu0 0
  %143 = vmatpush1.bf16.msra.mxu0 %v122
  %144 = vmatprep.subr.bf16.mxu0 0
  %145 = vmatpush1.bf16.msra.mxu0 %v123
  %146 = vmatprep.subr.bf16.mxu0 0
  %147 = vmatpush1.bf16.msra.mxu0 %v124
  %148 = vmatprep.subr.bf16.mxu0 0
  %149 = vmatpush1.bf16.msra.mxu0 %v125
  %150 = vmatprep.subr.bf16.mxu0 0
  %151 = vmatpush1.bf16.msra.mxu0 0
  %152 = vmatprep.subr.bf16.mxu0 0
  %153 = vmatpush1.bf16.msra.mxu0 0
  %154 = vmatprep.subr.bf16.mxu0 0
  %155 = vmatpush1.bf16.msra.mxu0 0
  %156 = vmatprep.subr.bf16.mxu0 0
  %157 = vmatpush1.bf16.msra.mxu0 0
  %158 = vmatprep.subr.bf16.mxu0 0
  %159 = vmatpush1.bf16.msra.mxu0 0
  %160 = vmatprep.subr.bf16.mxu0 0
  %161 = vmatpush1.bf16.msra.mxu0 0
  %162 = vmatprep.subr.bf16.mxu0 0
  %163 = vmatpush1.bf16.msra.mxu0 0
  %164 = vmatprep.subr.bf16.mxu0 0
  %165 = vmatpush1.bf16.msra.mxu0 0
  %166 = vmatprep.mubr.bf16.mxu0 0
  %167 = vmatmul.mubr.bf16.gmra.mrb[0].mxu0 %v69
  %v168 = vpop.f32.mrb[0].mxu0
  %v169 = vadd.f32 0.0, %v168
  %v170 = vpop.f32.mrb[0].mxu0
  %v171 = vpop.f32.mrb[0].mxu0
  %v172 = vpop.f32.mrb[0].mxu0
  %173 = vdwg.mxu0
  %v174 = vmax.f32 %v169, 0.0
  %v175 = vpack.c.bf16 %v174, %v174
  %v176 = vld [vmem:[%s3] sm:$0xf]
  %v177 = vld [vmem:[%s3 + $0x4] sm:$0xf]
  %v178 = vld [vmem:[%s3 + $0x8] sm:$0xf]
  %v179 = vld [vmem:[%s3 + $0xc] sm:$0xf]
  %v180 = vld [vmem:[%s3 + $0x10] sm:$0xf]
  %v181 = vld [vmem:[%s3 + $0x14] sm:$0xf]
  %v182 = vld [vmem:[%s3 + $0x18] sm:$0xf]
  %v183 = vld [vmem:[%s3 + $0x1c] sm:$0xf]
  %v184 = vld [vmem:[%s3 + $0x20] sm:$0xf]
  %v185 = vld [vmem:[%s3 + $0x24] sm:$0xf]
  %v186 = vld [vmem:[%s3 + $0x28] sm:$0xf]
  %v187 = vld [vmem:[%s3 + $0x2c] sm:$0xf]
  %v188 = vld [vmem:[%s3 + $0x30] sm:$0xf]
  %v189 = vld [vmem:[%s3 + $0x34] sm:$0xf]
  %v190 = vld [vmem:[%s3 + $0x38] sm:$0xf]
  %v191 = vld [vmem:[%s3 + $0x3c] sm:$0xf]
  %v208 = vunpack.c.l.b16 %v176
  %v209 = vunpack.c.l.b16 %v177
  %v210 = vunpack.c.l.b16 %v178
  %v211 = vunpack.c.l.b16 %v179
  %v212 = vunpack.c.l.b16 %v180
  %v213 = vunpack.c.l.b16 %v181
  %v214 = vunpack.c.l.b16 %v182
  %v215 = vunpack.c.l.b16 %v183
  %v216 = vunpack.c.l.b16 %v184
  %v217 = vunpack.c.l.b16 %v185
  %v218 = vunpack.c.l.b16 %v186
  %v219 = vunpack.c.l.b16 %v187
  %v220 = vunpack.c.l.b16 %v188
  %v221 = vunpack.c.l.b16 %v189
  %v222 = vunpack.c.l.b16 %v190
  %v223 = vunpack.c.l.b16 %v191
  %v224 = vpack.c.b16 %v209, %v208
  %v225 = vpack.c.b16 %v211, %v210
  %v226 = vpack.c.b16 %v213, %v212
  %v227 = vpack.c.b16 %v215, %v214
  %v228 = vpack.c.b16 %v217, %v216
  %v229 = vpack.c.b16 %v219, %v218
  %v230 = vpack.c.b16 %v221, %v220
  %v231 = vpack.c.b16 %v223, %v222
  %240 = vmatprep.subr.bf16.mxu0 0
  %241 = vmatpush1.bf16.msra.mxu0 %v224
  %242 = vmatprep.subr.bf16.mxu0 0
  %243 = vmatpush1.bf16.msra.mxu0 %v225
  %244 = vmatprep.subr.bf16.mxu0 0
  %245 = vmatpush1.bf16.msra.mxu0 %v226
  %246 = vmatprep.subr.bf16.mxu0 0
  %247 = vmatpush1.bf16.msra.mxu0 %v227
  %248 = vmatprep.subr.bf16.mxu0 0
  %249 = vmatpush1.bf16.msra.mxu0 %v228
  %250 = vmatprep.subr.bf16.mxu0 0
  %251 = vmatpush1.bf16.msra.mxu0 %v229
  %252 = vmatprep.subr.bf16.mxu0 0
  %253 = vmatpush1.bf16.msra.mxu0 %v230
  %254 = vmatprep.subr.bf16.mxu0 0
  %255 = vmatpush1.bf16.msra.mxu0 %v231
  %256 = vmatprep.subr.bf16.mxu0 0
  %257 = vmatpush1.bf16.msra.mxu0 0
  %258 = vmatprep.subr.bf16.mxu0 0
  %259 = vmatpush1.bf16.msra.mxu0 0
  %260 = vmatprep.subr.bf16.mxu0 0
  %261 = vmatpush1.bf16.msra.mxu0 0
  %262 = vmatprep.subr.bf16.mxu0 0
  %263 = vmatpush1.bf16.msra.mxu0 0
  %264 = vmatprep.subr.bf16.mxu0 0
  %265 = vmatpush1.bf16.msra.mxu0 0
  %266 = vmatprep.subr.bf16.mxu0 0
  %267 = vmatpush1.bf16.msra.mxu0 0
  %268 = vmatprep.subr.bf16.mxu0 0
  %269 = vmatpush1.bf16.msra.mxu0 0
  %270 = vmatprep.subr.bf16.mxu0 0
  %271 = vmatpush1.bf16.msra.mxu0 0
  %272 = vmatprep.mubr.bf16.mxu0 0
  %273 = vmatmul.mubr.bf16.gmra.mrb[0].mxu0 %v175
  %v274 = vpop.f32.mrb[0].mxu0
  %v275 = vadd.f32 0.0, %v274
  %v276 = vpop.f32.mrb[0].mxu0
  %v277 = vpop.f32.mrb[0].mxu0
  %v278 = vpop.f32.mrb[0].mxu0
  %279 = vdwg.mxu0
  %280 = vst.msk [vmem:[%s4] sm:$0xff] %vm20, %v275
  // Predicated region
  $region18: #{qnetwork_forward.1} parent=0 // pred_check
    _
  $region19: #{qnetwork_forward.1} parent=0 // pred_check_branch
    %282 = sbr.rel (0) target = $region21
  $region20: #{qnetwork_forward.1} parent=0 // pred_region
    _
  $region21: #{qnetwork_forward.1} parent=0 // pred_fallthru
    _
  // Predicated region
  $region22: #{qnetwork_forward.1} parent=0 // pred_check
    _
  $region23: #{qnetwork_forward.1} parent=0 // pred_check_branch
    %284 = sbr.rel (0) target = $region25
  $region24: #{qnetwork_forward.1} parent=0 // pred_region
    _
  $region25: #{qnetwork_forward.1} parent=0 // pred_fallthru
    _

</llo_original>
